<compile_context>
chip_gen: v6e
topology: v6e:2x2x1
jax: 0.10.0
libtpu: 0.0.40
codegen_flags: <defaults>
</compile_context>

<pallas_src>
import functools

import jax
import jax.numpy as jnp
from jax.experimental import pallas as pl
from jax.experimental.pallas import tpu as pltpu


def _round_up(x, m):
    return (x + m - 1) // m * m


# ----------------------------- fused Pallas kernel ---------------------------

def _fused_mlp_kernel(*refs, num_layers):
    """refs = (x_ref, w0, b0, w1, b1, ..., w{L-1}, b{L-1}, o_ref).

    Computes:  (Linear + ReLU) * (L-1)  ->  Linear  ->  log_softmax(dim=1)
    entirely in VMEM/vregs for one (TM, K0) row-tile of the batch.
    """
    x_ref = refs[0]
    o_ref = refs[-1]
    wb = refs[1:-1]

    h = x_ref[...].astype(jnp.float32)
    for l in range(num_layers):                       # unrolled at trace time
        w = wb[2 * l][...]                            # (K_l, N_l) resident in VMEM
        b = wb[2 * l + 1][...]                        # (1, N_l)  broadcast over rows
        h = jnp.dot(h, w, preferred_element_type=jnp.float32) + b
        if l < num_layers - 1:
            h = jnp.maximum(h, 0.0)                   # ReLU on hidden layers only
        # TODO(synk): training-mode Dropout(dropout_probability) not implemented;
        # eval-mode Dropout is the identity, which is what we compute here.

    # row-wise numerically stable log_softmax (dim=1), all in f32
    m = jnp.max(h, axis=1, keepdims=True)
    s = h - m
    lse = jnp.log(jnp.sum(jnp.exp(s), axis=1, keepdims=True))
    o_ref[...] = (s - lse).astype(o_ref.dtype)


def fused_mlp(x, params_t):
    """x: (M, K0) f32;  params_t: list of (w: (K, N), b: (1, N)) already transposed.

    Single pallas_call over a 1-D 'parallel' grid on the batch dimension.
    """
    M, K0 = x.shape
    num_layers = len(params_t)
    N_out = params_t[-1][0].shape[1]

    # Pad batch rows to a sublane multiple and pick a modest row-tile so the
    # double-buffered (TM, K0) activation block stays far below VMEM limits on
    # every generation (incl. v7x's 64 MiB).
    TM = min(256, _round_up(M, 8))
    M_pad = _round_up(M, TM)
    if M_pad != M:
        x = jnp.pad(x, ((0, M_pad - M), (0, 0)))      # padded rows sliced off below

    in_specs = [pl.BlockSpec((TM, K0), lambda i: (i, 0))]      # streamed activations
    flat_inputs = [x]
    for w, b in params_t:
        K, N = w.shape
        in_specs.append(pl.BlockSpec((K, N), lambda i: (0, 0)))   # VMEM-resident weight
        in_specs.append(pl.BlockSpec((1, N), lambda i: (0, 0)))   # VMEM-resident bias
        flat_inputs.append(w)
        flat_inputs.append(b)

    kern = functools.partial(_fused_mlp_kernel, num_layers=num_layers)
    out = pl.pallas_call(
        kern,
        out_shape=jax.ShapeDtypeStruct((M_pad, N_out), x.dtype),
        grid=(M_pad // TM,),
        in_specs=in_specs,
        out_specs=pl.BlockSpec((TM, N_out), lambda i: (i, 0)),
        compiler_params=pltpu.CompilerParams(
            dimension_semantics=("parallel",),        # megacore sharding on v7x
        ),
    )(*flat_inputs)

    return out[:M] if M_pad != M else out


# ------------------------------ MLP wrapper ----------------------------------

def init_mlp_params(key, layers_sizes):
    """nn.Linear-equivalent init, but weights stored pre-transposed as (in, out)
    and biases as (1, out) so no per-forward transpose is needed."""
    params = []
    for in_size, out_size in zip(layers_sizes[:-1], layers_sizes[1:]):
        key, kw, kb = jax.random.split(key, 3)
        bound = 1.0 / jnp.sqrt(jnp.float32(in_size))
        w = jax.random.uniform(kw, (in_size, out_size), jnp.float32, -bound, bound)
        b = jax.random.uniform(kb, (1, out_size), jnp.float32, -bound, bound)
        params.append((w, b))
    return params


@functools.partial(jax.jit, static_argnames=("layers_sizes",))
def mlp_forward(x, params, layers_sizes):
    """Reproduces MLP.forward: flatten, (Linear+ReLU)*, Linear, log_softmax(dim=1)."""
    x = x.reshape(-1, layers_sizes[0]).astype(jnp.float32)   # x.view(-1, layers_sizes[0])
    return fused_mlp(x, params)


# --------------------------------- main ---------------------------------------

if __name__ == "__main__":
    key = jax.random.PRNGKey(0)
    k_x, k_p = jax.random.split(key)

    # small NCHW input consistent with x.view(-1, layers_sizes[0])
    batch, channels, spatial = 2, 4, 16
    x = jax.random.normal(k_x, (batch, channels, spatial, spatial), jnp.float32)

    layers_sizes = (channels * spatial * spatial, 64, 32, 10)   # 1024 -> 64 -> 32 -> 10
    params = init_mlp_params(k_p, layers_sizes)

    out = mlp_forward(x, params, layers_sizes)
    out = jax.block_until_ready(out)

    assert out.shape == (batch, layers_sizes[-1]), out.shape
    # log_softmax rows must exponentiate-sum to ~1
    row_sums = jnp.sum(jnp.exp(out), axis=1)
    assert bool(jnp.all(jnp.abs(row_sums - 1.0) < 1e-4)), row_sums

    print("KERNEL_OK")
</pallas_src>

<mosaic_0001>
module attributes {stable_mosaic.version = 11 : i64} {
  func.func @_fused_mlp_kernel(%arg0: i32, %arg1: memref<8x1024xf32, #tpu.memory_space<vmem>>, %arg2: memref<1024x64xf32, #tpu.memory_space<vmem>>, %arg3: memref<1x64xf32, #tpu.memory_space<vmem>>, %arg4: memref<64x32xf32, #tpu.memory_space<vmem>>, %arg5: memref<1x32xf32, #tpu.memory_space<vmem>>, %arg6: memref<32x10xf32, #tpu.memory_space<vmem>>, %arg7: memref<1x10xf32, #tpu.memory_space<vmem>>, %arg8: memref<8x10xf32, #tpu.memory_space<vmem>>) attributes {dimension_semantics = [#tpu.dimension_semantics<parallel>], iteration_bounds = array<i64: 1>, scalar_prefetch = 0 : i64, scratch_operands = 0 : i64, tpu.core_type = #tpu.core_type<tc>, window_params = [{transform_indices = @transform_0, window_bounds = array<i64: 8, 1024>}, {pipeline_mode = #tpu.pipeline_mode<synchronous>, transform_indices = @transform_1, window_bounds = array<i64: 1024, 64>}, {pipeline_mode = #tpu.pipeline_mode<synchronous>, transform_indices = @transform_2, window_bounds = array<i64: 1, 64>}, {pipeline_mode = #tpu.pipeline_mode<synchronous>, transform_indices = @transform_3, window_bounds = array<i64: 64, 32>}, {pipeline_mode = #tpu.pipeline_mode<synchronous>, transform_indices = @transform_4, window_bounds = array<i64: 1, 32>}, {pipeline_mode = #tpu.pipeline_mode<synchronous>, transform_indices = @transform_5, window_bounds = array<i64: 32, 10>}, {pipeline_mode = #tpu.pipeline_mode<synchronous>, transform_indices = @transform_6, window_bounds = array<i64: 1, 10>}, {transform_indices = @transform_7, window_bounds = array<i64: 8, 10>}]} {
    %c0 = arith.constant 0 : index
    %c0_0 = arith.constant 0 : index
    %0 = vector.load %arg1[%c0, %c0_0] : memref<8x1024xf32, #tpu.memory_space<vmem>>, vector<8x1024xf32>
    %c0_1 = arith.constant 0 : index
    %c0_2 = arith.constant 0 : index
    %1 = vector.load %arg2[%c0_1, %c0_2] : memref<1024x64xf32, #tpu.memory_space<vmem>>, vector<1024x64xf32>
    %c0_3 = arith.constant 0 : index
    %c0_4 = arith.constant 0 : index
    %2 = vector.load %arg3[%c0_3, %c0_4] : memref<1x64xf32, #tpu.memory_space<vmem>>, vector<1x64xf32>
    %cst = arith.constant dense<0.000000e+00> : vector<8x64xf32>
    %3 = tpu.matmul %0, %1, %cst {dimension_numbers = #tpu.dot_dimension_numbers<[1], [0], [0], [1], [0, 0, 1, 1], [], []>} : vector<8x1024xf32>, vector<1024x64xf32>, vector<8x64xf32> -> vector<8x64xf32>
    %4 = vector.broadcast %2 : vector<1x64xf32> to vector<8x64xf32>
    %5 = arith.addf %3, %4 : vector<8x64xf32>
    %cst_5 = arith.constant 0.000000e+00 : f32
    %6 = vector.broadcast %cst_5 : f32 to vector<8x64xf32>
    %7 = arith.maximumf %5, %6 : vector<8x64xf32>
    %c0_6 = arith.constant 0 : index
    %c0_7 = arith.constant 0 : index
    %8 = vector.load %arg4[%c0_6, %c0_7] : memref<64x32xf32, #tpu.memory_space<vmem>>, vector<64x32xf32>
    %c0_8 = arith.constant 0 : index
    %c0_9 = arith.constant 0 : index
    %9 = vector.load %arg5[%c0_8, %c0_9] : memref<1x32xf32, #tpu.memory_space<vmem>>, vector<1x32xf32>
    %cst_10 = arith.constant dense<0.000000e+00> : vector<8x32xf32>
    %10 = tpu.matmul %7, %8, %cst_10 {dimension_numbers = #tpu.dot_dimension_numbers<[1], [0], [0], [1], [0, 0, 1, 1], [], []>} : vector<8x64xf32>, vector<64x32xf32>, vector<8x32xf32> -> vector<8x32xf32>
    %11 = vector.broadcast %9 : vector<1x32xf32> to vector<8x32xf32>
    %12 = arith.addf %10, %11 : vector<8x32xf32>
    %cst_11 = arith.constant 0.000000e+00 : f32
    %13 = vector.broadcast %cst_11 : f32 to vector<8x32xf32>
    %14 = arith.maximumf %12, %13 : vector<8x32xf32>
    %c0_12 = arith.constant 0 : index
    %c0_13 = arith.constant 0 : index
    %15 = vector.load %arg6[%c0_12, %c0_13] : memref<32x10xf32, #tpu.memory_space<vmem>>, vector<32x10xf32>
    %c0_14 = arith.constant 0 : index
    %c0_15 = arith.constant 0 : index
    %16 = vector.load %arg7[%c0_14, %c0_15] : memref<1x10xf32, #tpu.memory_space<vmem>>, vector<1x10xf32>
    %cst_16 = arith.constant dense<0.000000e+00> : vector<8x10xf32>
    %17 = tpu.matmul %14, %15, %cst_16 {dimension_numbers = #tpu.dot_dimension_numbers<[1], [0], [0], [1], [0, 0, 1, 1], [], []>} : vector<8x32xf32>, vector<32x10xf32>, vector<8x10xf32> -> vector<8x10xf32>
    %18 = vector.broadcast %16 : vector<1x10xf32> to vector<8x10xf32>
    %19 = arith.addf %17, %18 : vector<8x10xf32>
    %cst_17 = arith.constant dense<0xFF800000> : vector<8xf32>
    %20 = vector.multi_reduction <maximumf>, %19, %cst_17 [1] : vector<8x10xf32> to vector<8xf32>
    %21 = vector.shape_cast %20 : vector<8xf32> to vector<8x1xf32>
    %22 = vector.broadcast %21 : vector<8x1xf32> to vector<8x10xf32>
    %23 = arith.subf %19, %22 : vector<8x10xf32>
    %24 = math.exp %23 : vector<8x10xf32>
    %cst_18 = arith.constant dense<0.000000e+00> : vector<8xf32>
    %25 = vector.multi_reduction <add>, %24, %cst_18 [1] : vector<8x10xf32> to vector<8xf32>
    %26 = vector.shape_cast %25 : vector<8xf32> to vector<8x1xf32>
    %27 = math.log %26 : vector<8x1xf32>
    %28 = vector.broadcast %27 : vector<8x1xf32> to vector<8x10xf32>
    %29 = arith.subf %23, %28 : vector<8x10xf32>
    %c0_19 = arith.constant 0 : index
    %c0_20 = arith.constant 0 : index
    %30 = vector.load %arg8[%c0_19, %c0_20] : memref<8x10xf32, #tpu.memory_space<vmem>>, vector<8x10xf32>
    tpu.vector_store %arg8[%c0_19, %c0_20], %29 {strides = array<i32>} : memref<8x10xf32, #tpu.memory_space<vmem>>, vector<8x10xf32>,
    return
  }
  func.func @transform_0(%arg0: i32) -> (i32, i32) {
    %c0_i32 = arith.constant 0 : i32
    %c0_i32_0 = arith.constant 0 : i32
    return %arg0, %c0_i32 : i32, i32
  }
  func.func @transform_1(%arg0: i32) -> (i32, i32) {
    %c0_i32 = arith.constant 0 : i32
    %c0_i32_0 = arith.constant 0 : i32
    %c0_i32_1 = arith.constant 0 : i32
    return %c0_i32, %c0_i32_0 : i32, i32
  }
  func.func @transform_2(%arg0: i32) -> (i32, i32) {
    %c0_i32 = arith.constant 0 : i32
    %c0_i32_0 = arith.constant 0 : i32
    %c0_i32_1 = arith.constant 0 : i32
    return %c0_i32, %c0_i32_0 : i32, i32
  }
  func.func @transform_3(%arg0: i32) -> (i32, i32) {
    %c0_i32 = arith.constant 0 : i32
    %c0_i32_0 = arith.constant 0 : i32
    %c0_i32_1 = arith.constant 0 : i32
    return %c0_i32, %c0_i32_0 : i32, i32
  }
  func.func @transform_4(%arg0: i32) -> (i32, i32) {
    %c0_i32 = arith.constant 0 : i32
    %c0_i32_0 = arith.constant 0 : i32
    %c0_i32_1 = arith.constant 0 : i32
    return %c0_i32, %c0_i32_0 : i32, i32
  }
  func.func @transform_5(%arg0: i32) -> (i32, i32) {
    %c0_i32 = arith.constant 0 : i32
    %c0_i32_0 = arith.constant 0 : i32
    %c0_i32_1 = arith.constant 0 : i32
    return %c0_i32, %c0_i32_0 : i32, i32
  }
  func.func @transform_6(%arg0: i32) -> (i32, i32) {
    %c0_i32 = arith.constant 0 : i32
    %c0_i32_0 = arith.constant 0 : i32
    %c0_i32_1 = arith.constant 0 : i32
    return %c0_i32, %c0_i32_0 : i32, i32
  }
  func.func @transform_7(%arg0: i32) -> (i32, i32) {
    %c0_i32 = arith.constant 0 : i32
    %c0_i32_0 = arith.constant 0 : i32
    return %arg0, %c0_i32 : i32, i32
  }
}

</mosaic_0001>

<llo_original>
// kernel: mlp_forward.1
$region0: #{mlp_forward.1}
  #allocation0 [shape = 'u32[]', space=smem, size = 0x4, offset = 0x4, fixed_abs, tag = 'smem constant byte address 0x4 - core index']
  #allocation1 [shape = 'u32[144,128]{1,0:T(1,128)}', space=vmem, size = 0x12000, scoped, tag = 'internal scratch']
  %s0 = inlined_call_operand.vmem [shape: f32[8,1024], index: 0, kind: input, shape index: {}]
  %s1 = inlined_call_operand.vmem [shape: f32[1024,64], index: 1, kind: input, shape index: {}]
  %s2 = inlined_call_operand.vmem [shape: f32[1,64], index: 2, kind: input, shape index: {}]
  %s3 = inlined_call_operand.vmem [shape: f32[64,32], index: 3, kind: input, shape index: {}]
  %s4 = inlined_call_operand.vmem [shape: f32[1,32], index: 4, kind: input, shape index: {}]
  %s5 = inlined_call_operand.vmem [shape: f32[32,10], index: 5, kind: input, shape index: {}]
  %s6 = inlined_call_operand.vmem [shape: f32[1,10], index: 6, kind: input, shape index: {}]
  %s7 = inlined_call_operand.vmem [shape: f32[8,10], index: 7, kind: output, shape index: {}]
  %s8 = sld [smem:[#allocation0]]
  $region38: #{mlp_forward.1} parent=0
    _
  %s10 = ssub.s32 1, %s8
  %s11 = scalar_select 0, %s10, %s8
  // Predicated region
  $region2: #{mlp_forward.1} parent=0 // pred_check
    _
  $region3: #{mlp_forward.1} parent=0 // pred_check_branch
    %13 = sbr.rel (0) target = $region5
  $region4: #{mlp_forward.1} parent=0 // pred_region
    _
  $region5: #{mlp_forward.1} parent=0 // pred_fallthru
    _
  // Predicated region
  $region6: #{mlp_forward.1} parent=0 // pred_check
    _
  $region7: #{mlp_forward.1} parent=0 // pred_check_branch
    %15 = sbr.rel (0) target = $region9
  $region8: #{mlp_forward.1} parent=0 // pred_region
    _
  $region9: #{mlp_forward.1} parent=0 // pred_fallthru
    _
  // Predicated region
  $region10: #{mlp_forward.1} parent=0 // pred_check
    _
  $region11: #{mlp_forward.1} parent=0 // pred_check_branch
    %17 = sbr.rel (0) target = $region13
  $region12: #{mlp_forward.1} parent=0 // pred_region
    _
  $region13: #{mlp_forward.1} parent=0 // pred_fallthru
    _
  // Predicated region
  $region14: #{mlp_forward.1} parent=0 // pred_check
    _
  $region15: #{mlp_forward.1} parent=0 // pred_check_branch
    %19 = sbr.rel (0) target = $region17
  $region16: #{mlp_forward.1} parent=0 // pred_region
    _
  $region17: #{mlp_forward.1} parent=0 // pred_fallthru
    _
  // Predicated region
  $region18: #{mlp_forward.1} parent=0 // pred_check
    _
  $region19: #{mlp_forward.1} parent=0 // pred_check_branch
    %21 = sbr.rel (0) target = $region21
  $region20: #{mlp_forward.1} parent=0 // pred_region
    _
  $region21: #{mlp_forward.1} parent=0 // pred_fallthru
    _
  // Predicated region
  $region22: #{mlp_forward.1} parent=0 // pred_check
    _
  $region23: #{mlp_forward.1} parent=0 // pred_check_branch
    %23 = sbr.rel (0) target = $region25
  $region24: #{mlp_forward.1} parent=0 // pred_region
    _
  $region25: #{mlp_forward.1} parent=0 // pred_fallthru
    _
  // Predicated region
  $region26: #{mlp_forward.1} parent=0 // pred_check
    _
  $region27: #{mlp_forward.1} parent=0 // pred_check_branch
    %25 = sbr.rel (0) target = $region29
  $region28: #{mlp_forward.1} parent=0 // pred_region
    _
  $region29: #{mlp_forward.1} parent=0 // pred_fallthru
    _
  %v26 = vld [vmem:[%s0] sm:$0xff]
  %v27 = vld [vmem:[%s0 + $0x8] sm:$0xff]
  %v28 = vld [vmem:[%s0 + $0x10] sm:$0xff]
  %v29 = vld [vmem:[%s0 + $0x18] sm:$0xff]
  %v30 = vld [vmem:[%s0 + $0x20] sm:$0xff]
  %v31 = vld [vmem:[%s0 + $0x28] sm:$0xff]
  %v32 = vld [vmem:[%s0 + $0x30] sm:$0xff]
  %v33 = vld [vmem:[%s0 + $0x38] sm:$0xff]
  %v34 = vld [vmem:[%s1] sm:$0xff]
  %v35 = vld [vmem:[%s1 + $0x8] sm:$0xff]
  %v36 = vld [vmem:[%s1 + $0x10] sm:$0xff]
  %v37 = vld [vmem:[%s1 + $0x18] sm:$0xff]
  %v38 = vld [vmem:[%s1 + $0x20] sm:$0xff]
  %v39 = vld [vmem:[%s1 + $0x28] sm:$0xff]
  %v40 = vld [vmem:[%s1 + $0x30] sm:$0xff]
  %v41 = vld [vmem:[%s1 + $0x38] sm:$0xff]
  %v42 = vld [vmem:[%s1 + $0x40] sm:$0xff]
  %v43 = vld [vmem:[%s1 + $0x48] sm:$0xff]
  %v44 = vld [vmem:[%s1 + $0x50] sm:$0xff]
  %v45 = vld [vmem:[%s1 + $0x58] sm:$0xff]
  %v46 = vld [vmem:[%s1 + $0x60] sm:$0xff]
  %v47 = vld [vmem:[%s1 + $0x68] sm:$0xff]
  %v48 = vld [vmem:[%s1 + $0x70] sm:$0xff]
  %v49 = vld [vmem:[%s1 + $0x78] sm:$0xff]
  %v50 = vld [vmem:[%s1 + $0x80] sm:$0xff]
  %v51 = vld [vmem:[%s1 + $0x88] sm:$0xff]
  %v52 = vld [vmem:[%s1 + $0x90] sm:$0xff]
  %v53 = vld [vmem:[%s1 + $0x98] sm:$0xff]
  %v54 = vld [vmem:[%s1 + $0xa0] sm:$0xff]
  %v55 = vld [vmem:[%s1 + $0xa8] sm:$0xff]
  %v56 = vld [vmem:[%s1 + $0xb0] sm:$0xff]
  %v57 = vld [vmem:[%s1 + $0xb8] sm:$0xff]
  %v58 = vld [vmem:[%s1 + $0xc0] sm:$0xff]
  %v59 = vld [vmem:[%s1 + $0xc8] sm:$0xff]
  %v60 = vld [vmem:[%s1 + $0xd0] sm:$0xff]
  %v61 = vld [vmem:[%s1 + $0xd8] sm:$0xff]
  %v62 = vld [vmem:[%s1 + $0xe0] sm:$0xff]
  %v63 = vld [vmem:[%s1 + $0xe8] sm:$0xff]
  %v64 = vld [vmem:[%s1 + $0xf0] sm:$0xff]
  %v65 = vld [vmem:[%s1 + $0xf8] sm:$0xff]
  %v66 = vld [vmem:[%s1 + $0x100] sm:$0xff]
  %v67 = vld [vmem:[%s1 + $0x108] sm:$0xff]
  %v68 = vld [vmem:[%s1 + $0x110] sm:$0xff]
  %v69 = vld [vmem:[%s1 + $0x118] sm:$0xff]
  %v70 = vld [vmem:[%s1 + $0x120] sm:$0xff]
  %v71 = vld [vmem:[%s1 + $0x128] sm:$0xff]
  %v72 = vld [vmem:[%s1 + $0x130] sm:$0xff]
  %v73 = vld [vmem:[%s1 + $0x138] sm:$0xff]
  %v74 = vld [vmem:[%s1 + $0x140] sm:$0xff]
  %v75 = vld [vmem:[%s1 + $0x148] sm:$0xff]
  %v76 = vld [vmem:[%s1 + $0x150] sm:$0xff]
  %v77 = vld [vmem:[%s1 + $0x158] sm:$0xff]
  %v78 = vld [vmem:[%s1 + $0x160] sm:$0xff]
  %v79 = vld [vmem:[%s1 + $0x168] sm:$0xff]
  %v80 = vld [vmem:[%s1 + $0x170] sm:$0xff]
  %v81 = vld [vmem:[%s1 + $0x178] sm:$0xff]
  %v82 = vld [vmem:[%s1 + $0x180] sm:$0xff]
  %v83 = vld [vmem:[%s1 + $0x188] sm:$0xff]
  %v84 = vld [vmem:[%s1 + $0x190] sm:$0xff]
  %v85 = vld [vmem:[%s1 + $0x198] sm:$0xff]
  %v86 = vld [vmem:[%s1 + $0x1a0] sm:$0xff]
  %v87 = vld [vmem:[%s1 + $0x1a8] sm:$0xff]
  %v88 = vld [vmem:[%s1 + $0x1b0] sm:$0xff]
  %v89 = vld [vmem:[%s1 + $0x1b8] sm:$0xff]
  %v90 = vld [vmem:[%s1 + $0x1c0] sm:$0xff]
  %v91 = vld [vmem:[%s1 + $0x1c8] sm:$0xff]
  %v92 = vld [vmem:[%s1 + $0x1d0] sm:$0xff]
  %v93 = vld [vmem:[%s1 + $0x1d8] sm:$0xff]
  %v94 = vld [vmem:[%s1 + $0x1e0] sm:$0xff]
  %v95 = vld [vmem:[%s1 + $0x1e8] sm:$0xff]
  %v96 = vld [vmem:[%s1 + $0x1f0] sm:$0xff]
  %v97 = vld [vmem:[%s1 + $0x1f8] sm:$0xff]
  %v98 = vld [vmem:[%s1 + $0x200] sm:$0xff]
  %v99 = vld [vmem:[%s1 + $0x208] sm:$0xff]
  %v100 = vld [vmem:[%s1 + $0x210] sm:$0xff]
  %v101 = vld [vmem:[%s1 + $0x218] sm:$0xff]
  %v102 = vld [vmem:[%s1 + $0x220] sm:$0xff]
  %v103 = vld [vmem:[%s1 + $0x228] sm:$0xff]
  %v104 = vld [vmem:[%s1 + $0x230] sm:$0xff]
  %v105 = vld [vmem:[%s1 + $0x238] sm:$0xff]
  %v106 = vld [vmem:[%s1 + $0x240] sm:$0xff]
  %v107 = vld [vmem:[%s1 + $0x248] sm:$0xff]
  %v108 = vld [vmem:[%s1 + $0x250] sm:$0xff]
  %v109 = vld [vmem:[%s1 + $0x258] sm:$0xff]
  %v110 = vld [vmem:[%s1 + $0x260] sm:$0xff]
  %v111 = vld [vmem:[%s1 + $0x268] sm:$0xff]
  %v112 = vld [vmem:[%s1 + $0x270] sm:$0xff]
  %v113 = vld [vmem:[%s1 + $0x278] sm:$0xff]
  %v114 = vld [vmem:[%s1 + $0x280] sm:$0xff]
  %v115 = vld [vmem:[%s1 + $0x288] sm:$0xff]
  %v116 = vld [vmem:[%s1 + $0x290] sm:$0xff]
  %v117 = vld [vmem:[%s1 + $0x298] sm:$0xff]
  %v118 = vld [vmem:[%s1 + $0x2a0] sm:$0xff]
  %v119 = vld [vmem:[%s1 + $0x2a8] sm:$0xff]
  %v120 = vld [vmem:[%s1 + $0x2b0] sm:$0xff]
  %v121 = vld [vmem:[%s1 + $0x2b8] sm:$0xff]
  %v122 = vld [vmem:[%s1 + $0x2c0] sm:$0xff]
  %v123 = vld [vmem:[%s1 + $0x2c8] sm:$0xff]
  %v124 = vld [vmem:[%s1 + $0x2d0] sm:$0xff]
  %v125 = vld [vmem:[%s1 + $0x2d8] sm:$0xff]
  %v126 = vld [vmem:[%s1 + $0x2e0] sm:$0xff]
  %v127 = vld [vmem:[%s1 + $0x2e8] sm:$0xff]
  %v128 = vld [vmem:[%s1 + $0x2f0] sm:$0xff]
  %v129 = vld [vmem:[%s1 + $0x2f8] sm:$0xff]
  %v130 = vld [vmem:[%s1 + $0x300] sm:$0xff]
  %v131 = vld [vmem:[%s1 + $0x308] sm:$0xff]
  %v132 = vld [vmem:[%s1 + $0x310] sm:$0xff]
  %v133 = vld [vmem:[%s1 + $0x318] sm:$0xff]
  %v134 = vld [vmem:[%s1 + $0x320] sm:$0xff]
  %v135 = vld [vmem:[%s1 + $0x328] sm:$0xff]
  %v136 = vld [vmem:[%s1 + $0x330] sm:$0xff]
  %v137 = vld [vmem:[%s1 + $0x338] sm:$0xff]
  %v138 = vld [vmem:[%s1 + $0x340] sm:$0xff]
  %v139 = vld [vmem:[%s1 + $0x348] sm:$0xff]
  %v140 = vld [vmem:[%s1 + $0x350] sm:$0xff]
  %v141 = vld [vmem:[%s1 + $0x358] sm:$0xff]
  %v142 = vld [vmem:[%s1 + $0x360] sm:$0xff]
  %v143 = vld [vmem:[%s1 + $0x368] sm:$0xff]
  %v144 = vld [vmem:[%s1 + $0x370] sm:$0xff]
  %v145 = vld [vmem:[%s1 + $0x378] sm:$0xff]
  %v146 = vld [vmem:[%s1 + $0x380] sm:$0xff]
  %v147 = vld [vmem:[%s1 + $0x388] sm:$0xff]
  %v148 = vld [vmem:[%s1 + $0x390] sm:$0xff]
  %v149 = vld [vmem:[%s1 + $0x398] sm:$0xff]
  %v150 = vld [vmem:[%s1 + $0x3a0] sm:$0xff]
  %v151 = vld [vmem:[%s1 + $0x3a8] sm:$0xff]
  %v152 = vld [vmem:[%s1 + $0x3b0] sm:$0xff]
  %v153 = vld [vmem:[%s1 + $0x3b8] sm:$0xff]
  %v154 = vld [vmem:[%s1 + $0x3c0] sm:$0xff]
  %v155 = vld [vmem:[%s1 + $0x3c8] sm:$0xff]
  %v156 = vld [vmem:[%s1 + $0x3d0] sm:$0xff]
  %v157 = vld [vmem:[%s1 + $0x3d8] sm:$0xff]
  %v158 = vld [vmem:[%s1 + $0x3e0] sm:$0xff]
  %v159 = vld [vmem:[%s1 + $0x3e8] sm:$0xff]
  %v160 = vld [vmem:[%s1 + $0x3f0] sm:$0xff]
  %v161 = vld [vmem:[%s1 + $0x3f8] sm:$0xff]
  %v162 = vld [vmem:[%s2] sm:$0x1]
  %v164 = vlaneseq
  %v165 = vshrl.u32 %v164, 7
  %v166 = vsub.s32 0, %v165
  %v167 = vrot.slane %v162, %v166
  %169 = vmatprep.subr.mxu0 0.0
  %170 = vmatpush1.msra.mxu0 %v49
  %171 = vmatprep.subr.mxu0 0.0
  %172 = vmatpush1.msra.mxu0 %v48
  %173 = vmatprep.subr.mxu0 0.0
  %174 = vmatpush1.msra.mxu0 %v47
  %175 = vmatprep.subr.mxu0 0.0
  %176 = vmatpush1.msra.mxu0 %v46
  %177 = vmatprep.subr.mxu0 0.0
  %178 = vmatpush1.msra.mxu0 %v45
  %179 = vmatprep.subr.mxu0 0.0
  %180 = vmatpush1.msra.mxu0 %v44
  %181 = vmatprep.subr.mxu0 0.0
  %182 = vmatpush1.msra.mxu0 %v43
  %183 = vmatprep.subr.mxu0 0.0
  %184 = vmatpush1.msra.mxu0 %v42
  %185 = vmatprep.subr.mxu0 0.0
  %186 = vmatpush1.msra.mxu0 %v41
  %187 = vmatprep.subr.mxu0 0.0
  %188 = vmatpush1.msra.mxu0 %v40
  %189 = vmatprep.subr.mxu0 0.0
  %190 = vmatpush1.msra.mxu0 %v39
  %191 = vmatprep.subr.mxu0 0.0
  %192 = vmatpush1.msra.mxu0 %v38
  %193 = vmatprep.subr.mxu0 0.0
  %194 = vmatpush1.msra.mxu0 %v37
  %195 = vmatprep.subr.mxu0 0.0
  %196 = vmatpush1.msra.mxu0 %v36
  %197 = vmatprep.subr.mxu0 0.0
  %198 = vmatpush1.msra.mxu0 %v35
  %199 = vmatprep.subr.mxu0 0.0
  %200 = vmatpush1.msra.mxu0 %v34
  %201 = vmatprep.subr.mxu0 0.0
  %202 = vmatpush2.msra.mxu0 %v65
  %203 = vmatprep.subr.mxu0 0.0
  %204 = vmatpush2.msra.mxu0 %v64
  %205 = vmatprep.subr.mxu0 0.0
  %206 = vmatpush2.msra.mxu0 %v63
  %207 = vmatprep.subr.mxu0 0.0
  %208 = vmatpush2.msra.mxu0 %v62
  %209 = vmatprep.subr.mxu0 0.0
  %210 = vmatpush2.msra.mxu0 %v61
  %211 = vmatprep.subr.mxu0 0.0
  %212 = vmatpush2.msra.mxu0 %v60
  %213 = vmatprep.subr.mxu0 0.0
  %214 = vmatpush2.msra.mxu0 %v59
  %215 = vmatprep.subr.mxu0 0.0
  %216 = vmatpush2.msra.mxu0 %v58
  %217 = vmatprep.subr.mxu0 0.0
  %218 = vmatpush2.msra.mxu0 %v57
  %219 = vmatprep.subr.mxu0 0.0
  %220 = vmatpush2.msra.mxu0 %v56
  %221 = vmatprep.subr.mxu0 0.0
  %222 = vmatpush2.msra.mxu0 %v55
  %223 = vmatprep.subr.mxu0 0.0
  %224 = vmatpush2.msra.mxu0 %v54
  %225 = vmatprep.subr.mxu0 0.0
  %226 = vmatpush2.msra.mxu0 %v53
  %227 = vmatprep.subr.mxu0 0.0
  %228 = vmatpush2.msra.mxu0 %v52
  %229 = vmatprep.subr.mxu0 0.0
  %230 = vmatpush2.msra.mxu0 %v51
  %231 = vmatprep.subr.mxu0 0.0
  %232 = vmatpush2.msra.mxu0 %v50
  %233 = vmatprep.mubr.f32.mxu0 %v27
  %234 = vmatmul.mubr.f32.gmra.mxu0 %v26
  %v235 = vpop.f32.mrf.mxu0
  %v236 = vadd.f32 %v167, %v235
  %v237 = vpop.f32.mrf.mxu0
  %238 = vdwg.mxu0
  %239 = vmatprep.subr.mxu0 0.0
  %240 = vmatpush1.msra.mxu0 %v81
  %241 = vmatprep.subr.mxu0 0.0
  %242 = vmatpush1.msra.mxu0 %v80
  %243 = vmatprep.subr.mxu0 0.0
  %244 = vmatpush1.msra.mxu0 %v79
  %245 = vmatprep.subr.mxu0 0.0
  %246 = vmatpush1.msra.mxu0 %v78
  %247 = vmatprep.subr.mxu0 0.0
  %248 = vmatpush1.msra.mxu0 %v77
  %249 = vmatprep.subr.mxu0 0.0
  %250 = vmatpush1.msra.mxu0 %v76
  %251 = vmatprep.subr.mxu0 0.0
  %252 = vmatpush1.msra.mxu0 %v75
  %253 = vmatprep.subr.mxu0 0.0
  %254 = vmatpush1.msra.mxu0 %v74
  %255 = vmatprep.subr.mxu0 0.0
  %256 = vmatpush1.msra.mxu0 %v73
  %257 = vmatprep.subr.mxu0 0.0
  %258 = vmatpush1.msra.mxu0 %v72
  %259 = vmatprep.subr.mxu0 0.0
  %260 = vmatpush1.msra.mxu0 %v71
  %261 = vmatprep.subr.mxu0 0.0
  %262 = vmatpush1.msra.mxu0 %v70
  %263 = vmatprep.subr.mxu0 0.0
  %264 = vmatpush1.msra.mxu0 %v69
  %265 = vmatprep.subr.mxu0 0.0
  %266 = vmatpush1.msra.mxu0 %v68
  %267 = vmatprep.subr.mxu0 0.0
  %268 = vmatpush1.msra.mxu0 %v67
  %269 = vmatprep.subr.mxu0 0.0
  %270 = vmatpush1.msra.mxu0 %v66
  %271 = vmatprep.subr.mxu0 0.0
  %272 = vmatpush2.msra.mxu0 %v97
  %273 = vmatprep.subr.mxu0 0.0
  %274 = vmatpush2.msra.mxu0 %v96
  %275 = vmatprep.subr.mxu0 0.0
  %276 = vmatpush2.msra.mxu0 %v95
  %277 = vmatprep.subr.mxu0 0.0
  %278 = vmatpush2.msra.mxu0 %v94
  %279 = vmatprep.subr.mxu0 0.0
  %280 = vmatpush2.msra.mxu0 %v93
  %281 = vmatprep.subr.mxu0 0.0
  %282 = vmatpush2.msra.mxu0 %v92
  %283 = vmatprep.subr.mxu0 0.0
  %284 = vmatpush2.msra.mxu0 %v91
  %285 = vmatprep.subr.mxu0 0.0
  %286 = vmatpush2.msra.mxu0 %v90
  %287 = vmatprep.subr.mxu0 0.0
  %288 = vmatpush2.msra.mxu0 %v89
  %289 = vmatprep.subr.mxu0 0.0
  %290 = vmatpush2.msra.mxu0 %v88
  %291 = vmatprep.subr.mxu0 0.0
  %292 = vmatpush2.msra.mxu0 %v87
  %293 = vmatprep.subr.mxu0 0.0
  %294 = vmatpush2.msra.mxu0 %v86
  %295 = vmatprep.subr.mxu0 0.0
  %296 = vmatpush2.msra.mxu0 %v85
  %297 = vmatprep.subr.mxu0 0.0
  %298 = vmatpush2.msra.mxu0 %v84
  %299 = vmatprep.subr.mxu0 0.0
  %300 = vmatpush2.msra.mxu0 %v83
  %301 = vmatprep.subr.mxu0 0.0
  %302 = vmatpush2.msra.mxu0 %v82
  %303 = vmatprep.mubr.f32.mxu0 %v29
  %304 = vmatmul.mubr.f32.gmra.mxu0 %v28
  %v305 = vpop.f32.mrf.mxu0
  %v306 = vadd.f32 %v236, %v305
  %v307 = vpop.f32.mrf.mxu0
  %308 = vdwg.mxu0
  %309 = vmatprep.subr.mxu0 0.0
  %310 = vmatpush1.msra.mxu0 %v113
  %311 = vmatprep.subr.mxu0 0.0
  %312 = vmatpush1.msra.mxu0 %v112
  %313 = vmatprep.subr.mxu0 0.0
  %314 = vmatpush1.msra.mxu0 %v111
  %315 = vmatprep.subr.mxu0 0.0
  %316 = vmatpush1.msra.mxu0 %v110
  %317 = vmatprep.subr.mxu0 0.0
  %318 = vmatpush1.msra.mxu0 %v109
  %319 = vmatprep.subr.mxu0 0.0
  %320 = vmatpush1.msra.mxu0 %v108
  %321 = vmatprep.subr.mxu0 0.0
  %322 = vmatpush1.msra.mxu0 %v107
  %323 = vmatprep.subr.mxu0 0.0
  %324 = vmatpush1.msra.mxu0 %v106
  %325 = vmatprep.subr.mxu0 0.0
  %326 = vmatpush1.msra.mxu0 %v105
  %327 = vmatprep.subr.mxu0 0.0
  %328 = vmatpush1.msra.mxu0 %v104
  %329 = vmatprep.subr.mxu0 0.0
  %330 = vmatpush1.msra.mxu0 %v103
  %331 = vmatprep.subr.mxu0 0.0
  %332 = vmatpush1.msra.mxu0 %v102
  %333 = vmatprep.subr.mxu0 0.0
  %334 = vmatpush1.msra.mxu0 %v101
  %335 = vmatprep.subr.mxu0 0.0
  %336 = vmatpush1.msra.mxu0 %v100
  %337 = vmatprep.subr.mxu0 0.0
  %338 = vmatpush1.msra.mxu0 %v99
  %339 = vmatprep.subr.mxu0 0.0
  %340 = vmatpush1.msra.mxu0 %v98
  %341 = vmatprep.subr.mxu0 0.0
  %342 = vmatpush2.msra.mxu0 %v129
  %343 = vmatprep.subr.mxu0 0.0
  %344 = vmatpush2.msra.mxu0 %v128
  %345 = vmatprep.subr.mxu0 0.0
  %346 = vmatpush2.msra.mxu0 %v127
  %347 = vmatprep.subr.mxu0 0.0
  %348 = vmatpush2.msra.mxu0 %v126
  %349 = vmatprep.subr.mxu0 0.0
  %350 = vmatpush2.msra.mxu0 %v125
  %351 = vmatprep.subr.mxu0 0.0
  %352 = vmatpush2.msra.mxu0 %v124
  %353 = vmatprep.subr.mxu0 0.0
  %354 = vmatpush2.msra.mxu0 %v123
  %355 = vmatprep.subr.mxu0 0.0
  %356 = vmatpush2.msra.mxu0 %v122
  %357 = vmatprep.subr.mxu0 0.0
  %358 = vmatpush2.msra.mxu0 %v121
  %359 = vmatprep.subr.mxu0 0.0
  %360 = vmatpush2.msra.mxu0 %v120
  %361 = vmatprep.subr.mxu0 0.0
  %362 = vmatpush2.msra.mxu0 %v119
  %363 = vmatprep.subr.mxu0 0.0
  %364 = vmatpush2.msra.mxu0 %v118
  %365 = vmatprep.subr.mxu0 0.0
  %366 = vmatpush2.msra.mxu0 %v117
  %367 = vmatprep.subr.mxu0 0.0
  %368 = vmatpush2.msra.mxu0 %v116
  %369 = vmatprep.subr.mxu0 0.0
  %370 = vmatpush2.msra.mxu0 %v115
  %371 = vmatprep.subr.mxu0 0.0
  %372 = vmatpush2.msra.mxu0 %v114
  %373 = vmatprep.mubr.f32.mxu0 %v31
  %374 = vmatmul.mubr.f32.gmra.mxu0 %v30
  %v375 = vpop.f32.mrf.mxu0
  %v376 = vadd.f32 %v306, %v375
  %v377 = vpop.f32.mrf.mxu0
  %378 = vdwg.mxu0
  %379 = vmatprep.subr.mxu0 0.0
  %380 = vmatpush1.msra.mxu0 %v145
  %381 = vmatprep.subr.mxu0 0.0
  %382 = vmatpush1.msra.mxu0 %v144
  %383 = vmatprep.subr.mxu0 0.0
  %384 = vmatpush1.msra.mxu0 %v143
  %385 = vmatprep.subr.mxu0 0.0
  %386 = vmatpush1.msra.mxu0 %v142
  %387 = vmatprep.subr.mxu0 0.0
  %388 = vmatpush1.msra.mxu0 %v141
  %389 = vmatprep.subr.mxu0 0.0
  %390 = vmatpush1.msra.mxu0 %v140
  %391 = vmatprep.subr.mxu0 0.0
  %392 = vmatpush1.msra.mxu0 %v139
  %393 = vmatprep.subr.mxu0 0.0
  %394 = vmatpush1.msra.mxu0 %v138
  %395 = vmatprep.subr.mxu0 0.0
  %396 = vmatpush1.msra.mxu0 %v137
  %397 = vmatprep.subr.mxu0 0.0
  %398 = vmatpush1.msra.mxu0 %v136
  %399 = vmatprep.subr.mxu0 0.0
  %400 = vmatpush1.msra.mxu0 %v135
  %401 = vmatprep.subr.mxu0 0.0
  %402 = vmatpush1.msra.mxu0 %v134
  %403 = vmatprep.subr.mxu0 0.0
  %404 = vmatpush1.msra.mxu0 %v133
  %405 = vmatprep.subr.mxu0 0.0
  %406 = vmatpush1.msra.mxu0 %v132
  %407 = vmatprep.subr.mxu0 0.0
  %408 = vmatpush1.msra.mxu0 %v131
  %409 = vmatprep.subr.mxu0 0.0
  %410 = vmatpush1.msra.mxu0 %v130
  %411 = vmatprep.subr.mxu0 0.0
  %412 = vmatpush2.msra.mxu0 %v161
  %413 = vmatprep.subr.mxu0 0.0
  %414 = vmatpush2.msra.mxu0 %v160
  %415 = vmatprep.subr.mxu0 0.0
  %416 = vmatpush2.msra.mxu0 %v159
  %417 = vmatprep.subr.mxu0 0.0
  %418 = vmatpush2.msra.mxu0 %v158
  %419 = vmatprep.subr.mxu0 0.0
  %420 = vmatpush2.msra.mxu0 %v157
  %421 = vmatprep.subr.mxu0 0.0
  %422 = vmatpush2.msra.mxu0 %v156
  %423 = vmatprep.subr.mxu0 0.0
  %424 = vmatpush2.msra.mxu0 %v155
  %425 = vmatprep.subr.mxu0 0.0
  %426 = vmatpush2.msra.mxu0 %v154
  %427 = vmatprep.subr.mxu0 0.0
  %428 = vmatpush2.msra.mxu0 %v153
  %429 = vmatprep.subr.mxu0 0.0
  %430 = vmatpush2.msra.mxu0 %v152
  %431 = vmatprep.subr.mxu0 0.0
  %432 = vmatpush2.msra.mxu0 %v151
  %433 = vmatprep.subr.mxu0 0.0
  %434 = vmatpush2.msra.mxu0 %v150
  %435 = vmatprep.subr.mxu0 0.0
  %436 = vmatpush2.msra.mxu0 %v149
  %437 = vmatprep.subr.mxu0 0.0
  %438 = vmatpush2.msra.mxu0 %v148
  %439 = vmatprep.subr.mxu0 0.0
  %440 = vmatpush2.msra.mxu0 %v147
  %441 = vmatprep.subr.mxu0 0.0
  %442 = vmatpush2.msra.mxu0 %v146
  %443 = vmatprep.mubr.f32.mxu0 %v33
  %444 = vmatmul.mubr.f32.gmra.mxu0 %v32
  %v445 = vpop.f32.mrf.mxu0
  %v446 = vadd.f32 %v376, %v445
  %v447 = vpop.f32.mrf.mxu0
  %448 = vdwg.mxu0
  %v449 = vmax.f32 %v446, 0.0
  %v450 = vld [vmem:[%s3] sm:$0xff]
  %v451 = vld [vmem:[%s3 + $0x8] sm:$0xff]
  %v452 = vld [vmem:[%s3 + $0x10] sm:$0xff]
  %v453 = vld [vmem:[%s3 + $0x18] sm:$0xff]
  %v454 = vld [vmem:[%s3 + $0x20] sm:$0xff]
  %v455 = vld [vmem:[%s3 + $0x28] sm:$0xff]
  %v456 = vld [vmem:[%s3 + $0x30] sm:$0xff]
  %v457 = vld [vmem:[%s3 + $0x38] sm:$0xff]
  %v458 = vld [vmem:[%s4] sm:$0x1]
  %v460 = vlaneseq
  %v461 = vshrl.u32 %v460, 7
  %v462 = vsub.s32 0, %v461
  %v463 = vrot.slane %v458, %v462
  %vm465 = vcmask 523264
  %v467 = vsel %vm465, %v449, 0
  %469 = vmatprep.subr.mxu0 0.0
  %470 = vmatpush1.msra.mxu0 0.0
  %471 = vmatprep.subr.mxu0 0.0
  %472 = vmatpush1.msra.mxu0 0.0
  %473 = vmatprep.subr.mxu0 0.0
  %474 = vmatpush1.msra.mxu0 0.0
  %475 = vmatprep.subr.mxu0 0.0
  %476 = vmatpush1.msra.mxu0 0.0
  %477 = vmatprep.subr.mxu0 0.0
  %478 = vmatpush1.msra.mxu0 0.0
  %479 = vmatprep.subr.mxu0 0.0
  %480 = vmatpush1.msra.mxu0 0.0
  %481 = vmatprep.subr.mxu0 0.0
  %482 = vmatpush1.msra.mxu0 0.0
  %483 = vmatprep.subr.mxu0 0.0
  %484 = vmatpush1.msra.mxu0 0.0
  %485 = vmatprep.subr.mxu0 0.0
  %486 = vmatpush1.msra.mxu0 %v457
  %487 = vmatprep.subr.mxu0 0.0
  %488 = vmatpush1.msra.mxu0 %v456
  %489 = vmatprep.subr.mxu0 0.0
  %490 = vmatpush1.msra.mxu0 %v455
  %491 = vmatprep.subr.mxu0 0.0
  %492 = vmatpush1.msra.mxu0 %v454
  %493 = vmatprep.subr.mxu0 0.0
  %494 = vmatpush1.msra.mxu0 %v453
  %495 = vmatprep.subr.mxu0 0.0
  %496 = vmatpush1.msra.mxu0 %v452
  %497 = vmatprep.subr.mxu0 0.0
  %498 = vmatpush1.msra.mxu0 %v451
  %499 = vmatprep.subr.mxu0 0.0
  %500 = vmatpush1.msra.mxu0 %v450
  %501 = vmatprep.subr.mxu0 0.0
  %502 = vmatpush2.msra.mxu0 0.0
  %503 = vmatprep.subr.mxu0 0.0
  %504 = vmatpush2.msra.mxu0 0.0
  %505 = vmatprep.subr.mxu0 0.0
  %506 = vmatpush2.msra.mxu0 0.0
  %507 = vmatprep.subr.mxu0 0.0
  %508 = vmatpush2.msra.mxu0 0.0
  %509 = vmatprep.subr.mxu0 0.0
  %510 = vmatpush2.msra.mxu0 0.0
  %511 = vmatprep.subr.mxu0 0.0
  %512 = vmatpush2.msra.mxu0 0.0
  %513 = vmatprep.subr.mxu0 0.0
  %514 = vmatpush2.msra.mxu0 0.0
  %515 = vmatprep.subr.mxu0 0.0
  %516 = vmatpush2.msra.mxu0 0.0
  %517 = vmatprep.subr.mxu0 0.0
  %518 = vmatpush2.msra.mxu0 0.0
  %519 = vmatprep.subr.mxu0 0.0
  %520 = vmatpush2.msra.mxu0 0.0
  %521 = vmatprep.subr.mxu0 0.0
  %522 = vmatpush2.msra.mxu0 0.0
  %523 = vmatprep.subr.mxu0 0.0
  %524 = vmatpush2.msra.mxu0 0.0
  %525 = vmatprep.subr.mxu0 0.0
  %526 = vmatpush2.msra.mxu0 0.0
  %527 = vmatprep.subr.mxu0 0.0
  %528 = vmatpush2.msra.mxu0 0.0
  %529 = vmatprep.subr.mxu0 0.0
  %530 = vmatpush2.msra.mxu0 0.0
  %531 = vmatprep.subr.mxu0 0.0
  %532 = vmatpush2.msra.mxu0 0.0
  %533 = vmatprep.mubr.f32.mxu0 0.0
  %534 = vmatmul.mubr.f32.gmra.mxu0 %v467
  %v535 = vpop.f32.mrf.mxu0
  %v536 = vadd.f32 %v463, %v535
  %v537 = vpop.f32.mrf.mxu0
  %538 = vdwg.mxu0
  %v539 = vmax.f32 %v536, 0.0
  %v540 = vld [vmem:[%s5] sm:$0xff]
  %v541 = vld [vmem:[%s5 + $0x8] sm:$0xff]
  %v542 = vld [vmem:[%s5 + $0x10] sm:$0xff]
  %v543 = vld [vmem:[%s5 + $0x18] sm:$0xff]
  %v544 = vld [vmem:[%s6] sm:$0x1]
  %v546 = vlaneseq
  %v547 = vshrl.u32 %v546, 7
  %v548 = vsub.s32 0, %v547
  %v549 = vrot.slane %v544, %v548
  %vm551 = vcmask 261120
  %v553 = vsel %vm551, %v539, 0
  %555 = vmatprep.subr.mxu0 0.0
  %556 = vmatpush1.msra.mxu0 0.0
  %557 = vmatprep.subr.mxu0 0.0
  %558 = vmatpush1.msra.mxu0 0.0
  %559 = vmatprep.subr.mxu0 0.0
  %560 = vmatpush1.msra.mxu0 0.0
  %561 = vmatprep.subr.mxu0 0.0
  %562 = vmatpush1.msra.mxu0 0.0
  %563 = vmatprep.subr.mxu0 0.0
  %564 = vmatpush1.msra.mxu0 0.0
  %565 = vmatprep.subr.mxu0 0.0
  %566 = vmatpush1.msra.mxu0 0.0
  %567 = vmatprep.subr.mxu0 0.0
  %568 = vmatpush1.msra.mxu0 0.0
  %569 = vmatprep.subr.mxu0 0.0
  %570 = vmatpush1.msra.mxu0 0.0
  %571 = vmatprep.subr.mxu0 0.0
  %572 = vmatpush1.msra.mxu0 0.0
  %573 = vmatprep.subr.mxu0 0.0
  %574 = vmatpush1.msra.mxu0 0.0
  %575 = vmatprep.subr.mxu0 0.0
  %576 = vmatpush1.msra.mxu0 0.0
  %577 = vmatprep.subr.mxu0 0.0
  %578 = vmatpush1.msra.mxu0 0.0
  %579 = vmatprep.subr.mxu0 0.0
  %580 = vmatpush1.msra.mxu0 %v543
  %581 = vmatprep.subr.mxu0 0.0
  %582 = vmatpush1.msra.mxu0 %v542
  %583 = vmatprep.subr.mxu0 0.0
  %584 = vmatpush1.msra.mxu0 %v541
  %585 = vmatprep.subr.mxu0 0.0
  %586 = vmatpush1.msra.mxu0 %v540
  %587 = vmatprep.subr.mxu0 0.0
  %588 = vmatpush2.msra.mxu0 0.0
  %589 = vmatprep.subr.mxu0 0.0
  %590 = vmatpush2.msra.mxu0 0.0
  %591 = vmatprep.subr.mxu0 0.0
  %592 = vmatpush2.msra.mxu0 0.0
  %593 = vmatprep.subr.mxu0 0.0
  %594 = vmatpush2.msra.mxu0 0.0
  %595 = vmatprep.subr.mxu0 0.0
  %596 = vmatpush2.msra.mxu0 0.0
  %597 = vmatprep.subr.mxu0 0.0
  %598 = vmatpush2.msra.mxu0 0.0
  %599 = vmatprep.subr.mxu0 0.0
  %600 = vmatpush2.msra.mxu0 0.0
  %601 = vmatprep.subr.mxu0 0.0
  %602 = vmatpush2.msra.mxu0 0.0
  %603 = vmatprep.subr.mxu0 0.0
  %604 = vmatpush2.msra.mxu0 0.0
  %605 = vmatprep.subr.mxu0 0.0
  %606 = vmatpush2.msra.mxu0 0.0
  %607 = vmatprep.subr.mxu0 0.0
  %608 = vmatpush2.msra.mxu0 0.0
  %609 = vmatprep.subr.mxu0 0.0
  %610 = vmatpush2.msra.mxu0 0.0
  %611 = vmatprep.subr.mxu0 0.0
  %612 = vmatpush2.msra.mxu0 0.0
  %613 = vmatprep.subr.mxu0 0.0
  %614 = vmatpush2.msra.mxu0 0.0
  %615 = vmatprep.subr.mxu0 0.0
  %616 = vmatpush2.msra.mxu0 0.0
  %617 = vmatprep.subr.mxu0 0.0
  %618 = vmatpush2.msra.mxu0 0.0
  %619 = vmatprep.mubr.f32.mxu0 0.0
  %620 = vmatmul.mubr.f32.gmra.mxu0 %v553
  %v621 = vpop.f32.mrf.mxu0
  %v622 = vadd.f32 %v549, %v621
  %v623 = vpop.f32.mrf.mxu0
  %624 = vdwg.mxu0
  %vm625 = vcmask 80896
  %v626 = vsel %vm625, %v622, -inf
  %627 = vmax.xlane.f32.xlu0 %v626
  %v628 = vpop.xlane.xlu0 %627
  %v629 = vsub.f32 %v622, %v628
  %v630 = vmul.f32 %v629, 1.442695
  %v631 = vpow.pop %v630
  %v632 = vsel %vm625, %v631, 0.0
  %633 = vadd.xlane.f32.xlu0 %v632
  %v634 = vpop.xlane.xlu0 %633
  %v635 = vlog2.pop %v634
  %v636 = vmul.f32 %v635, 0.6931472
  %v637 = vsub.f32 %v629, %v636
  %638 = vst.msk [vmem:[%s7] sm:$0xff] %vm625, %v637
  // Predicated region
  $region30: #{mlp_forward.1} parent=0 // pred_check
    _
  $region31: #{mlp_forward.1} parent=0 // pred_check_branch
    %640 = sbr.rel (0) target = $region33
  $region32: #{mlp_forward.1} parent=0 // pred_region
    _
  $region33: #{mlp_forward.1} parent=0 // pred_fallthru
    _
  // Predicated region
  $region34: #{mlp_forward.1} parent=0 // pred_check
    _
  $region35: #{mlp_forward.1} parent=0 // pred_check_branch
    %642 = sbr.rel (0) target = $region37
  $region36: #{mlp_forward.1} parent=0 // pred_region
    _
  $region37: #{mlp_forward.1} parent=0 // pred_fallthru
    _

</llo_original>
